<compile_context>
chip_gen: v7x
topology: tpu7x:2x2x1
jax: 0.10.0
libtpu: 0.0.40
codegen_flags: <defaults>
</compile_context>

<pallas_src>
import jax
import jax.numpy as jnp
from jax import lax
from jax.experimental import pallas as pl
from jax.experimental.pallas import tpu as pltpu

CHUNK_ROWS = 128  # rows per in-kernel compute chunk (keeps h at 16 vregs)


def _round_up(a, b):
    return ((a + b - 1) // b) * b


def mlp_probe_kernel(x_ref, w1_ref, b1_ref, w2_ref, b2_ref, o_ref):
    tb = x_ref.shape[0]
    n_chunks = tb // CHUNK_ROWS

    w1 = w1_ref[...]        # (D, HP) bf16, VMEM-resident
    b1 = b1_ref[...]        # (1, HP) f32
    w2 = w2_ref[...]        # (8, HP) f32 (row 0 = real layer-2 weights)
    b2 = b2_ref[0, 0]       # scalar bias from SMEM

    def chunk_fwd(r):
        # Stream x in its HBM dtype; cast to bf16 just before the MXU dot.
        xc = x_ref[pl.ds(r, CHUNK_ROWS), :].astype(jnp.bfloat16)         # (128, D)
        h = jnp.dot(xc, w1, preferred_element_type=jnp.float32)          # (128, HP) MXU
        h = jnp.maximum(h + b1, 0.0)                                     # f32 bias + ReLU (VPU)
        # Layer 2: contract HP (lane dim of both operands) so the per-row
        # outputs land directly on lanes -> lane-dense (1, 128) row.
        logits = lax.dot_general(w2, h, (((1,), (1,)), ((), ())),
                                 preferred_element_type=jnp.float32)     # (8, 128)
        o_row = jax.nn.sigmoid(logits[0:1, :] + b2)                      # (1, 128)
        o_ref[:, pl.ds(r, CHUNK_ROWS)] = o_row.astype(o_ref.dtype)

    if n_chunks == 1:
        chunk_fwd(0)
    else:
        def body(c, carry):
            chunk_fwd(pl.multiple_of(c * CHUNK_ROWS, CHUNK_ROWS))
            return carry
        lax.fori_loop(0, n_chunks, body, 0)


def mlp_probe(x, w1, b1, w2, b2, *, tb=4096):
    """x: [B, d]  w1: [d, H]  b1: [1, H]  w2: [H, 1]  b2: [1, 1]  ->  [B, 1] f32."""
    B, D = x.shape
    H = w1.shape[1]
    HP = _round_up(H, 128)  # pad hidden dim to lane width

    # Zero-padded params: padded b1 entries and padded w2 columns are zero, so
    # the extra hidden lanes contribute exactly nothing after ReLU * w2.
    w1p = (jnp.zeros((D, HP), jnp.float32)
           .at[:, :H].set(w1.astype(jnp.float32))
           .astype(jnp.bfloat16))
    b1p = jnp.zeros((1, HP), jnp.float32).at[:, :H].set(
        jnp.reshape(b1, (1, H)).astype(jnp.float32))
    w2p = jnp.zeros((8, HP), jnp.float32).at[0, :H].set(
        jnp.reshape(w2, (H,)).astype(jnp.float32))
    b2p = jnp.reshape(b2, (1, 1)).astype(jnp.float32)

    # Batch tile: multiple of 128, large (amortizes per-step pipeline cost),
    # clamped so tiny batches stay a single small tile. x is NOT padded: the
    # ragged last block is padded by Pallas and its rows are discarded below.
    TB = max(CHUNK_ROWS, min(_round_up(tb, CHUNK_ROWS), _round_up(B, CHUNK_ROWS)))
    n_blocks = pl.cdiv(B, TB)
    BP = n_blocks * TB

    # VMEM budget from actual padded layouts, capped at 48 MiB (v7x-safe).
    x_tile = TB * _round_up(D, 128) * x.dtype.itemsize   # lane-padded x block / buffer
    o_tile = 8 * TB * 4                                  # (1,TB) block -> 8 sublanes
    weights = _round_up(D, 8) * HP * 2 + 2 * 8 * HP * 4  # w1(bf16) + b1 + w2 (f32)
    scratch = 4 * CHUNK_ROWS * HP * 4                    # per-chunk h headroom
    vmem_limit = int(min(48 << 20,
                         max(32 << 20,
                             2 * (x_tile + o_tile) + 2 * weights + scratch + (4 << 20))))

    out = pl.pallas_call(
        mlp_probe_kernel,
        out_shape=jax.ShapeDtypeStruct((1, BP), jnp.float32),
        grid=(n_blocks,),
        in_specs=[
            pl.BlockSpec((TB, D), lambda i: (i, 0)),     # x: streamed per batch tile
            pl.BlockSpec((D, HP), lambda i: (0, 0)),     # w1: VMEM-resident
            pl.BlockSpec((1, HP), lambda i: (0, 0)),     # b1: resident
            pl.BlockSpec((8, HP), lambda i: (0, 0)),     # w2 tile: resident
            pl.BlockSpec((1, 1), lambda i: (0, 0),
                         memory_space=pltpu.MemorySpace.SMEM),  # b2 scalar
        ],
        out_specs=pl.BlockSpec((1, TB), lambda i: (0, i)),      # lane-dense output
        compiler_params=pltpu.CompilerParams(
            # Batch tiles are independent -> shard across TensorCores on v7x.
            # TODO(synk): profile v7x TC occupancy; switch to pltpu.CORE_PARALLEL
            # if only one core picks up work.
            dimension_semantics=("parallel",),
            vmem_limit_bytes=vmem_limit,
        ),
    )(x, w1p, b1p, w2p, b2p)

    return out.reshape(-1, 1)[:B]


if __name__ == "__main__":
    B, D, H = 8, 32, 100

    key = jax.random.PRNGKey(0)
    kx, kw1, kb1, kw2, kb2 = jax.random.split(key, 5)

    # Deterministic synthetic parameters (shapes match nn.Linear(d,100), nn.Linear(100,1)).
    x = jax.random.normal(kx, (B, D), dtype=jnp.float32)
    w1 = jax.random.normal(kw1, (D, H), dtype=jnp.float32) * 0.1   # [in, out]
    b1 = jax.random.normal(kb1, (1, H), dtype=jnp.float32) * 0.1
    w2 = jax.random.normal(kw2, (H, 1), dtype=jnp.float32) * 0.1
    b2 = jax.random.normal(kb2, (1, 1), dtype=jnp.float32) * 0.1

    out = mlp_probe(x, w1, b1, w2, b2)
    out = jax.block_until_ready(out)
    assert out.shape == (B, 1)

    # Reference 1: emulate the kernel's bf16 layer-1 inputs (tight-ish tolerance;
    # layer 2 runs on the MXU, so allow a little extra slack).
    x16 = x.astype(jnp.bfloat16).astype(jnp.float32)
    w116 = w1.astype(jnp.bfloat16).astype(jnp.float32)
    ref_bf16 = jax.nn.sigmoid(jnp.maximum(x16 @ w116 + b1, 0.0) @ w2 + b2)
    assert jnp.allclose(out, ref_bf16, atol=2e-3, rtol=2e-3)

    # Reference 2: full f32 PyTorch-equivalent forward (loose tolerance for bf16 stream).
    ref_f32 = jax.nn.sigmoid(jnp.maximum(x @ w1 + b1, 0.0) @ w2 + b2)
    assert jnp.allclose(out, ref_f32, atol=5e-2, rtol=5e-2)

    print("KERNEL_OK")
</pallas_src>

<mosaic_0001>
module attributes {stable_mosaic.version = 11 : i64} {
  func.func @mlp_probe_kernel(%arg0: i32, %arg1: memref<128x32xf32, #tpu.memory_space<vmem>>, %arg2: memref<32x128xbf16, #tpu.memory_space<vmem>>, %arg3: memref<1x128xf32, #tpu.memory_space<vmem>>, %arg4: memref<8x128xf32, #tpu.memory_space<vmem>>, %arg5: memref<1x1xf32, #tpu.memory_space<smem>>, %arg6: memref<1x128xf32, #tpu.memory_space<vmem>>) attributes {dimension_semantics = [#tpu.dimension_semantics<parallel>], iteration_bounds = array<i64: 1>, scalar_prefetch = 0 : i64, scratch_operands = 0 : i64, tpu.core_type = #tpu.core_type<tc>, window_params = [{transform_indices = @transform_0, window_bounds = array<i64: 128, 32>}, {pipeline_mode = #tpu.pipeline_mode<synchronous>, transform_indices = @transform_1, window_bounds = array<i64: 32, 128>}, {pipeline_mode = #tpu.pipeline_mode<synchronous>, transform_indices = @transform_2, window_bounds = array<i64: 1, 128>}, {pipeline_mode = #tpu.pipeline_mode<synchronous>, transform_indices = @transform_3, window_bounds = array<i64: 8, 128>}, {transform_indices = @transform_4, window_bounds = array<i64: 1, 1>}, {transform_indices = @transform_5, window_bounds = array<i64: 1, 128>}]} {
    %c0 = arith.constant 0 : index
    %c0_0 = arith.constant 0 : index
    %0 = vector.load %arg2[%c0, %c0_0] : memref<32x128xbf16, #tpu.memory_space<vmem>>, vector<32x128xbf16>
    %c0_1 = arith.constant 0 : index
    %c0_2 = arith.constant 0 : index
    %1 = vector.load %arg3[%c0_1, %c0_2] : memref<1x128xf32, #tpu.memory_space<vmem>>, vector<1x128xf32>
    %c0_3 = arith.constant 0 : index
    %c0_4 = arith.constant 0 : index
    %2 = vector.load %arg4[%c0_3, %c0_4] : memref<8x128xf32, #tpu.memory_space<vmem>>, vector<8x128xf32>
    %c0_5 = arith.constant 0 : index
    %c0_6 = arith.constant 0 : index
    %3 = memref.load %arg5[%c0_5, %c0_6] : memref<1x1xf32, #tpu.memory_space<smem>>
    %c0_7 = arith.constant 0 : index
    %c0_8 = arith.constant 0 : index
    %4 = vector.load %arg1[%c0_7, %c0_8] : memref<128x32xf32, #tpu.memory_space<vmem>>, vector<128x32xf32>
    %5 = arith.truncf %4 : vector<128x32xf32> to vector<128x32xbf16>
    %cst = arith.constant dense<0.000000e+00> : vector<128x128xf32>
    %6 = tpu.matmul %5, %0, %cst {dimension_numbers = #tpu.dot_dimension_numbers<[1], [0], [0], [1], [0, 0, 1, 1], [], []>} : vector<128x32xbf16>, vector<32x128xbf16>, vector<128x128xf32> -> vector<128x128xf32>
    %7 = vector.broadcast %1 : vector<1x128xf32> to vector<128x128xf32>
    %8 = arith.addf %6, %7 : vector<128x128xf32>
    %cst_9 = arith.constant 0.000000e+00 : f32
    %9 = vector.broadcast %cst_9 : f32 to vector<128x128xf32>
    %10 = arith.maximumf %8, %9 : vector<128x128xf32>
    %cst_10 = arith.constant dense<0.000000e+00> : vector<8x128xf32>
    %11 = tpu.matmul %2, %10, %cst_10 {dimension_numbers = #tpu.dot_dimension_numbers<[1], [1], [0], [0], [0, 0, 1, 0], [], []>} : vector<8x128xf32>, vector<128x128xf32>, vector<8x128xf32> -> vector<8x128xf32>
    %12 = vector.extract_strided_slice %11 {offsets = [0, 0], sizes = [1, 128], strides = [1, 1]} : vector<8x128xf32> to vector<1x128xf32>
    %13 = vector.broadcast %3 : f32 to vector<1x128xf32>
    %14 = arith.addf %12, %13 : vector<1x128xf32>
    %15 = arith.negf %14 : vector<1x128xf32>
    %16 = math.exp %15 : vector<1x128xf32>
    %cst_11 = arith.constant 1.000000e+00 : f32
    %17 = vector.broadcast %cst_11 : f32 to vector<1x128xf32>
    %18 = arith.addf %17, %16 : vector<1x128xf32>
    %19 = arith.divf %17, %18 : vector<1x128xf32>
    %c0_12 = arith.constant 0 : index
    %c0_13 = arith.constant 0 : index
    %20 = vector.load %arg6[%c0_12, %c0_13] : memref<1x128xf32, #tpu.memory_space<vmem>>, vector<1x128xf32>
    tpu.vector_store %arg6[%c0_12, %c0_13], %19 {strides = array<i32>} : memref<1x128xf32, #tpu.memory_space<vmem>>, vector<1x128xf32>,
    return
  }
  func.func @transform_0(%arg0: i32) -> (i32, i32) {
    %c0_i32 = arith.constant 0 : i32
    %c0_i32_0 = arith.constant 0 : i32
    return %arg0, %c0_i32 : i32, i32
  }
  func.func @transform_1(%arg0: i32) -> (i32, i32) {
    %c0_i32 = arith.constant 0 : i32
    %c0_i32_0 = arith.constant 0 : i32
    %c0_i32_1 = arith.constant 0 : i32
    return %c0_i32, %c0_i32_0 : i32, i32
  }
  func.func @transform_2(%arg0: i32) -> (i32, i32) {
    %c0_i32 = arith.constant 0 : i32
    %c0_i32_0 = arith.constant 0 : i32
    %c0_i32_1 = arith.constant 0 : i32
    return %c0_i32, %c0_i32_0 : i32, i32
  }
  func.func @transform_3(%arg0: i32) -> (i32, i32) {
    %c0_i32 = arith.constant 0 : i32
    %c0_i32_0 = arith.constant 0 : i32
    %c0_i32_1 = arith.constant 0 : i32
    return %c0_i32, %c0_i32_0 : i32, i32
  }
  func.func @transform_4(%arg0: i32) -> (i32, i32) {
    %c0_i32 = arith.constant 0 : i32
    %c0_i32_0 = arith.constant 0 : i32
    %c0_i32_1 = arith.constant 0 : i32
    return %c0_i32, %c0_i32_0 : i32, i32
  }
  func.func @transform_5(%arg0: i32) -> (i32, i32) {
    %c0_i32 = arith.constant 0 : i32
    %c0_i32_0 = arith.constant 0 : i32
    return %c0_i32, %arg0 : i32, i32
  }
}

</mosaic_0001>

<llo_original>
// kernel: tpu_custom_call.1
$region0: #{tpu_custom_call.1}
  #allocation0 [shape = 'u32[]', space=smem, size = 0x4, offset = 0x4, fixed_abs, tag = 'smem constant byte address 0x4 - core index']
  #allocation1 [shape = 'u32[144,128]{1,0:T(1,128)}', space=vmem, size = 0x12000, scoped, tag = 'internal scratch']
  #allocation2 [shape = 'f32[1,1]{1,0:T(1,128)S(6)}', space=smem, size = 0x200, scoped, tag = 'scoped memory for tpu_custom_call.1']
  %s0 = inlined_call_operand.hbm [shape: f32[8,32], index: 0, kind: input, shape index: {}]
  %s1 = inlined_call_operand.hbm [shape: bf16[32,128], index: 1, kind: input, shape index: {}]
  %s2 = inlined_call_operand.vmem [shape: f32[1,128], index: 2, kind: input, shape index: {}]
  %s3 = inlined_call_operand.vmem [shape: f32[8,128], index: 3, kind: input, shape index: {}]
  %s4 = inlined_call_operand.<no memory space> [shape: f32[1,1], index: 4, kind: input, shape index: {}]
  %s5 = inlined_call_operand.hbm [shape: f32[1,128], index: 5, kind: output, shape index: {}]
  %s6 = sld [smem:[#allocation0]]
  $region38: #{tpu_custom_call.1} parent=0
    _
  %s8 = ssub.s32 1, %s6
  %s9 = scalar_select 0, %s8, %s6
  %10 = sst [smem:[#allocation2]] %s4
  $region1: #{tpu_custom_call.1} parent=0
    #allocation3 [shape = 'u8[65536]{0}', space=vmem, size = 0x10000, scoped, tag = 'input window, operand 0, single buffered']
    #allocation4 [shape = 's32[1]{0}', space=sflag, size = 0x4, scoped, tag = 'scoped memory for tpu_custom_call.1']
    #allocation5 [shape = 's32[1]{0}', space=sflag, size = 0x4, scoped, tag = 'scoped memory for tpu_custom_call.1']
    #allocation6 [shape = 'u8[8192]{0}', space=vmem, size = 0x2000, scoped, tag = 'input window, operand 1, single buffered']
    #allocation7 [shape = 's32[1]{0}', space=sflag, size = 0x4, scoped, tag = 'scoped memory for tpu_custom_call.1']
    #allocation8 [shape = 'u8[512]{0}', space=vmem, size = 0x400, scoped, tag = 'output window, operand 0, single buffered']
    %11 = vsyncpa [#allocation4], 0
    %12 = vsyncpa [#allocation7], 0
    %13 = vsyncpa [#allocation5], 0
    // Predicated region
    $region2: #{tpu_custom_call.1} parent=1 // pred_check
      _
    $region3: #{tpu_custom_call.1} parent=1 // pred_check_branch
      %15 = sbr.rel (0) target = $region5
    $region4: #{tpu_custom_call.1} parent=1 // pred_region
      %s17 = ssub.s32 2048, 128
      %18 = vsyncadd [#allocation4], %s17
      %s19 = sshll.u32 [#allocation3], 4
      %s20 = int_to_ptr.vmem [resolvable:$true] %s19
      %25 = dma.hbm_to_vmem [thread:$0]  %s0, 128, %s20, [#allocation4], 128, 128, 8
    $region5: #{tpu_custom_call.1} parent=1 // pred_fallthru
      _
    // Predicated region
    $region6: #{tpu_custom_call.1} parent=1 // pred_check
      _
    $region7: #{tpu_custom_call.1} parent=1 // pred_check_branch
      %27 = sbr.rel (0) target = $region9
    $region8: #{tpu_custom_call.1} parent=1 // pred_region
      %s29 = ssub.s32 256, 256
      %30 = vsyncadd [#allocation7], %s29
      %s31 = sshll.u32 [#allocation6], 4
      %s32 = int_to_ptr.vmem [resolvable:$true] %s31
      %37 = dma.hbm_to_vmem [thread:$0]  %s1, 256, %s32, [#allocation7], 64, 64, 4
    $region9: #{tpu_custom_call.1} parent=1 // pred_fallthru
      _
    // Predicated region
    $region10: #{tpu_custom_call.1} parent=1 // pred_check
      _
    $region11: #{tpu_custom_call.1} parent=1 // pred_check_branch
      %39 = sbr.rel (0) target = $region13
    $region12: #{tpu_custom_call.1} parent=1 // pred_region
      _
    $region13: #{tpu_custom_call.1} parent=1 // pred_fallthru
      _
    // Predicated region
    $region14: #{tpu_custom_call.1} parent=1 // pred_check
      _
    $region15: #{tpu_custom_call.1} parent=1 // pred_check_branch
      %41 = sbr.rel (0) target = $region17
    $region16: #{tpu_custom_call.1} parent=1 // pred_region
      _
    $region17: #{tpu_custom_call.1} parent=1 // pred_fallthru
      _
    // Predicated region
    $region18: #{tpu_custom_call.1} parent=1 // pred_check
      _
    $region19: #{tpu_custom_call.1} parent=1 // pred_check_branch
      %43 = sbr.rel (0) target = $region21
    $region20: #{tpu_custom_call.1} parent=1 // pred_region
      _
    $region21: #{tpu_custom_call.1} parent=1 // pred_fallthru
      _
    // Predicated region
    $region22: #{tpu_custom_call.1} parent=1 // pred_check
      _
    $region23: #{tpu_custom_call.1} parent=1 // pred_check_branch
      %45 = sbr.rel (0) target = $region25
    $region24: #{tpu_custom_call.1} parent=1 // pred_region
      %46 = dma.done [#allocation4], 2048
    $region25: #{tpu_custom_call.1} parent=1 // pred_fallthru
      _
    // Predicated region
    $region26: #{tpu_custom_call.1} parent=1 // pred_check
      _
    $region27: #{tpu_custom_call.1} parent=1 // pred_check_branch
      %48 = sbr.rel (0) target = $region29
    $region28: #{tpu_custom_call.1} parent=1 // pred_region
      %49 = dma.done [#allocation7], 256
    $region29: #{tpu_custom_call.1} parent=1 // pred_fallthru
      _
    %v51 = vld [vmem:[#allocation6] sm:$0xf]
    %v52 = vld [vmem:[#allocation6 + $0x4] sm:$0xf]
    %v53 = vld [vmem:[#allocation6 + $0x8] sm:$0xf]
    %v54 = vld [vmem:[#allocation6 + $0xc] sm:$0xf]
    %v55 = vld [vmem:[%s2] sm:$0x1]
    %v56 = vld [vmem:[%s3] sm:$0xff]
    %s57 = sld [smem:[#allocation2]]
    %v58 = vld [vmem:[#allocation3] sm:$0xff]
    %v59 = vld [vmem:[#allocation3 + $0x8] sm:$0xff]
    %v60 = vld [vmem:[#allocation3 + $0x10] sm:$0xff]
    %v61 = vld [vmem:[#allocation3 + $0x18] sm:$0xff]
    %v62 = vld [vmem:[#allocation3 + $0x20] sm:$0xff]
    %v63 = vld [vmem:[#allocation3 + $0x28] sm:$0xff]
    %v64 = vld [vmem:[#allocation3 + $0x30] sm:$0xff]
    %v65 = vld [vmem:[#allocation3 + $0x38] sm:$0xff]
    %v66 = vld [vmem:[#allocation3 + $0x40] sm:$0xff]
    %v67 = vld [vmem:[#allocation3 + $0x48] sm:$0xff]
    %v68 = vld [vmem:[#allocation3 + $0x50] sm:$0xff]
    %v69 = vld [vmem:[#allocation3 + $0x58] sm:$0xff]
    %v70 = vld [vmem:[#allocation3 + $0x60] sm:$0xff]
    %v71 = vld [vmem:[#allocation3 + $0x68] sm:$0xff]
    %v72 = vld [vmem:[#allocation3 + $0x70] sm:$0xff]
    %v73 = vld [vmem:[#allocation3 + $0x78] sm:$0xff]
    %v74 = vpack.c.bf16 %v59, %v58
    %v75 = vpack.c.bf16 %v61, %v60
    %v76 = vpack.c.bf16 %v63, %v62
    %v77 = vpack.c.bf16 %v65, %v64
    %v78 = vpack.c.bf16 %v67, %v66
    %v79 = vpack.c.bf16 %v69, %v68
    %v80 = vpack.c.bf16 %v71, %v70
    %v81 = vpack.c.bf16 %v73, %v72
    %v83 = vlaneseq
    %v84 = vshrl.u32 %v83, 7
    %v85 = vsub.s32 0, %v84
    %v86 = vrot.slane %v55, %v85
    %v92 = vunpack.c.l.b16 %v51
    %v93 = vunpack.c.l.b16 %v52
    %v94 = vunpack.c.l.b16 %v53
    %v95 = vunpack.c.l.b16 %v54
    %v96 = vpack.c.b16 %v93, %v92
    %v97 = vpack.c.b16 %v95, %v94
    %vm100 = vcmask 261120
    %v102 = vsel %vm100, %v74, 0
    %v105 = vsel %vm100, %v75, 0
    %v108 = vsel %vm100, %v76, 0
    %v111 = vsel %vm100, %v77, 0
    %v114 = vsel %vm100, %v78, 0
    %v117 = vsel %vm100, %v79, 0
    %v120 = vsel %vm100, %v80, 0
    %v123 = vsel %vm100, %v81, 0
    %125 = vmatprep.subr.bf16.mxu0 0
    %126 = vmatpush1.bf16.msra.mxu0 %v96
    %127 = vmatprep.subr.bf16.mxu0 0
    %128 = vmatpush1.bf16.msra.mxu0 %v97
    %129 = vmatprep.subr.bf16.mxu0 0
    %130 = vmatpush1.bf16.msra.mxu0 0
    %131 = vmatprep.subr.bf16.mxu0 0
    %132 = vmatpush1.bf16.msra.mxu0 0
    %133 = vmatprep.subr.bf16.mxu0 0
    %134 = vmatpush1.bf16.msra.mxu0 0
    %135 = vmatprep.subr.bf16.mxu0 0
    %136 = vmatpush1.bf16.msra.mxu0 0
    %137 = vmatprep.subr.bf16.mxu0 0
    %138 = vmatpush1.bf16.msra.mxu0 0
    %139 = vmatprep.subr.bf16.mxu0 0
    %140 = vmatpush1.bf16.msra.mxu0 0
    %141 = vmatprep.subr.bf16.mxu0 0
    %142 = vmatpush1.bf16.msra.mxu0 0
    %143 = vmatprep.subr.bf16.mxu0 0
    %144 = vmatpush1.bf16.msra.mxu0 0
    %145 = vmatprep.subr.bf16.mxu0 0
    %146 = vmatpush1.bf16.msra.mxu0 0
    %147 = vmatprep.subr.bf16.mxu0 0
    %148 = vmatpush1.bf16.msra.mxu0 0
    %149 = vmatprep.subr.bf16.mxu0 0
    %150 = vmatpush1.bf16.msra.mxu0 0
    %151 = vmatprep.subr.bf16.mxu0 0
    %152 = vmatpush1.bf16.msra.mxu0 0
    %153 = vmatprep.subr.bf16.mxu0 0
    %154 = vmatpush1.bf16.msra.mxu0 0
    %155 = vmatprep.subr.bf16.mxu0 0
    %156 = vmatpush1.bf16.msra.mxu0 0
    %157 = vmatprep.mubr.bf16.mxu0 0
    %158 = vmatmul.mubr.bf16.gmra.mrb[0].mxu0 %v102
    %v159 = vpop.f32.mrb[0].mxu0
    %v160 = vadd.f32 %v86, %v159
    %v161 = vpop.f32.mrb[0].mxu0
    %v162 = vpop.f32.mrb[0].mxu0
    %v163 = vadd.f32 %v86, %v162
    %v164 = vpop.f32.mrb[0].mxu0
    %165 = vmatprep.mubr.bf16.mxu0 0
    %166 = vmatmul.mubr.bf16.gmra.mrb[0].mxu0 %v105
    %v167 = vpop.f32.mrb[0].mxu0
    %v168 = vadd.f32 %v86, %v167
    %v169 = vpop.f32.mrb[0].mxu0
    %v170 = vpop.f32.mrb[0].mxu0
    %v171 = vadd.f32 %v86, %v170
    %v172 = vpop.f32.mrb[0].mxu0
    %173 = vmatprep.mubr.bf16.mxu0 0
    %174 = vmatmul.mubr.bf16.gmra.mrb[0].mxu0 %v108
    %v175 = vpop.f32.mrb[0].mxu0
    %v176 = vadd.f32 %v86, %v175
    %v177 = vpop.f32.mrb[0].mxu0
    %v178 = vpop.f32.mrb[0].mxu0
    %v179 = vadd.f32 %v86, %v178
    %v180 = vpop.f32.mrb[0].mxu0
    %181 = vmatprep.mubr.bf16.mxu0 0
    %182 = vmatmul.mubr.bf16.gmra.mrb[0].mxu0 %v111
    %v183 = vpop.f32.mrb[0].mxu0
    %v184 = vadd.f32 %v86, %v183
    %v185 = vpop.f32.mrb[0].mxu0
    %v186 = vpop.f32.mrb[0].mxu0
    %v187 = vadd.f32 %v86, %v186
    %v188 = vpop.f32.mrb[0].mxu0
    %189 = vmatprep.mubr.bf16.mxu0 0
    %190 = vmatmul.mubr.bf16.gmra.mrb[0].mxu0 %v114
    %v191 = vpop.f32.mrb[0].mxu0
    %v192 = vadd.f32 %v86, %v191
    %v193 = vpop.f32.mrb[0].mxu0
    %v194 = vpop.f32.mrb[0].mxu0
    %v195 = vadd.f32 %v86, %v194
    %v196 = vpop.f32.mrb[0].mxu0
    %197 = vmatprep.mubr.bf16.mxu0 0
    %198 = vmatmul.mubr.bf16.gmra.mrb[0].mxu0 %v117
    %v199 = vpop.f32.mrb[0].mxu0
    %v200 = vadd.f32 %v86, %v199
    %v201 = vpop.f32.mrb[0].mxu0
    %v202 = vpop.f32.mrb[0].mxu0
    %v203 = vadd.f32 %v86, %v202
    %v204 = vpop.f32.mrb[0].mxu0
    %205 = vmatprep.mubr.bf16.mxu0 0
    %206 = vmatmul.mubr.bf16.gmra.mrb[0].mxu0 %v120
    %v207 = vpop.f32.mrb[0].mxu0
    %v208 = vadd.f32 %v86, %v207
    %v209 = vpop.f32.mrb[0].mxu0
    %v210 = vpop.f32.mrb[0].mxu0
    %v211 = vadd.f32 %v86, %v210
    %v212 = vpop.f32.mrb[0].mxu0
    %213 = vmatprep.mubr.bf16.mxu0 0
    %214 = vmatmul.mubr.bf16.gmra.mrb[0].mxu0 %v123
    %v215 = vpop.f32.mrb[0].mxu0
    %v216 = vadd.f32 %v86, %v215
    %v217 = vpop.f32.mrb[0].mxu0
    %v218 = vpop.f32.mrb[0].mxu0
    %v219 = vadd.f32 %v86, %v218
    %v220 = vpop.f32.mrb[0].mxu0
    %221 = vdwg.mxu0
    %v222 = vmax.f32 %v160, 0.0
    %v223 = vmax.f32 %v163, 0.0
    %v224 = vmax.f32 %v168, 0.0
    %v225 = vmax.f32 %v171, 0.0
    %v226 = vmax.f32 %v176, 0.0
    %v227 = vmax.f32 %v179, 0.0
    %v228 = vmax.f32 %v184, 0.0
    %v229 = vmax.f32 %v187, 0.0
    %v230 = vmax.f32 %v192, 0.0
    %v231 = vmax.f32 %v195, 0.0
    %v232 = vmax.f32 %v200, 0.0
    %v233 = vmax.f32 %v203, 0.0
    %v234 = vmax.f32 %v208, 0.0
    %v235 = vmax.f32 %v211, 0.0
    %v236 = vmax.f32 %v216, 0.0
    %v237 = vmax.f32 %v219, 0.0
    %238 = vmatprep.subr.mxu0 0.0
    %239 = vmatpush1.xpose.msra.mxu0 %v222
    %240 = vmatprep.subr.mxu0 0.0
    %241 = vmatpush1.xpose.msra.mxu0 %v223
    %242 = vmatprep.subr.mxu0 0.0
    %243 = vmatpush1.xpose.msra.mxu0 %v224
    %244 = vmatprep.subr.mxu0 0.0
    %245 = vmatpush1.xpose.msra.mxu0 %v225
    %246 = vmatprep.subr.mxu0 0.0
    %247 = vmatpush1.xpose.msra.mxu0 %v226
    %248 = vmatprep.subr.mxu0 0.0
    %249 = vmatpush1.xpose.msra.mxu0 %v227
    %250 = vmatprep.subr.mxu0 0.0
    %251 = vmatpush1.xpose.msra.mxu0 %v228
    %252 = vmatprep.subr.mxu0 0.0
    %253 = vmatpush1.xpose.msra.mxu0 %v229
    %254 = vmatprep.subr.mxu0 0.0
    %255 = vmatpush1.xpose.msra.mxu0 %v230
    %256 = vmatprep.subr.mxu0 0.0
    %257 = vmatpush1.xpose.msra.mxu0 %v231
    %258 = vmatprep.subr.mxu0 0.0
    %259 = vmatpush1.xpose.msra.mxu0 %v232
    %260 = vmatprep.subr.mxu0 0.0
    %261 = vmatpush1.xpose.msra.mxu0 %v233
    %262 = vmatprep.subr.mxu0 0.0
    %263 = vmatpush1.xpose.msra.mxu0 %v234
    %264 = vmatprep.subr.mxu0 0.0
    %265 = vmatpush1.xpose.msra.mxu0 %v235
    %266 = vmatprep.subr.mxu0 0.0
    %267 = vmatpush1.xpose.msra.mxu0 %v236
    %268 = vmatprep.subr.mxu0 0.0
    %269 = vmatpush1.xpose.msra.mxu0 %v237
    %270 = vmatprep.subr.mxu0 0.0
    %271 = vmatpush1.xpose.msra.mxu0 0.0
    %272 = vmatprep.subr.mxu0 0.0
    %273 = vmatpush1.xpose.msra.mxu0 0.0
    %274 = vmatprep.subr.mxu0 0.0
    %275 = vmatpush1.xpose.msra.mxu0 0.0
    %276 = vmatprep.subr.mxu0 0.0
    %277 = vmatpush1.xpose.msra.mxu0 0.0
    %278 = vmatprep.subr.mxu0 0.0
    %279 = vmatpush1.xpose.msra.mxu0 0.0
    %280 = vmatprep.subr.mxu0 0.0
    %281 = vmatpush1.xpose.msra.mxu0 0.0
    %282 = vmatprep.subr.mxu0 0.0
    %283 = vmatpush1.xpose.msra.mxu0 0.0
    %284 = vmatprep.subr.mxu0 0.0
    %285 = vmatpush1.xpose.msra.mxu0 0.0
    %286 = vmatprep.subr.mxu0 0.0
    %287 = vmatpush1.xpose.msra.mxu0 0.0
    %288 = vmatprep.subr.mxu0 0.0
    %289 = vmatpush1.xpose.msra.mxu0 0.0
    %290 = vmatprep.subr.mxu0 0.0
    %291 = vmatpush1.xpose.msra.mxu0 0.0
    %292 = vmatprep.subr.mxu0 0.0
    %293 = vmatpush1.xpose.msra.mxu0 0.0
    %294 = vmatprep.subr.mxu0 0.0
    %295 = vmatpush1.xpose.msra.mxu0 0.0
    %296 = vmatprep.subr.mxu0 0.0
    %297 = vmatpush1.xpose.msra.mxu0 0.0
    %298 = vmatprep.subr.mxu0 0.0
    %299 = vmatpush1.xpose.msra.mxu0 0.0
    %300 = vmatprep.subr.mxu0 0.0
    %301 = vmatpush1.xpose.msra.mxu0 0.0
    %302 = vmatprep.mubr.f32.mxu0 0.0
    %303 = vmatmul.mubr.f32.gmra.mrb[0].mxu0 %v56
    %v304 = vpop.f32.mrb[0].mxu0
    %v305 = vadd.f32 0.0, %v304
    %v306 = vpop.f32.mrb[0].mxu0
    %307 = vdwg.mxu0
    %v308 = vstv %s57
    %v309 = vadd.f32 %v305, %v308
    %v310 = vxor.u32 %v309, 2147483648
    %v311 = vmul.f32 %v310, 1.442695
    %v312 = vpow.pop %v311
    %v313 = vadd.f32 %v312, 1.0
    %v314 = vrcp.pop %v313
    %v315 = vmul.f32 1.0, %v314
    %316 = vst [vmem:[#allocation8] sm:$0x1] %v315
    // Predicated region
    $region30: #{tpu_custom_call.1} parent=1 // pred_check
      _
    $region31: #{tpu_custom_call.1} parent=1 // pred_check_branch
      %318 = sbr.rel (0) target = $region33
    $region32: #{tpu_custom_call.1} parent=1 // pred_region
      %s320 = ssub.s32 16, 16
      %321 = vsyncadd [#allocation5], %s320
      %s323 = sshll.u32 [#allocation8], 4
      %s324 = int_to_ptr.vmem [resolvable:$true] %s323
      %326 = dma.vmem_to_hbm [thread:$0]  %s324, 16, %s5, [#allocation5]
    $region33: #{tpu_custom_call.1} parent=1 // pred_fallthru
      _
    // Predicated region
    $region34: #{tpu_custom_call.1} parent=1 // pred_check
      _
    $region35: #{tpu_custom_call.1} parent=1 // pred_check_branch
      %328 = sbr.rel (0) target = $region37
    $region36: #{tpu_custom_call.1} parent=1 // pred_region
      %329 = dma.done [#allocation5], 16
    $region37: #{tpu_custom_call.1} parent=1 // pred_fallthru
      _
    %330 = vsyncpa [#allocation4], 1
    %331 = vsyncpa [#allocation7], 1
    %332 = vsyncpa [#allocation5], 1

</llo_original>
